<compile_context>
chip_gen: v7x
topology: tpu7x:2x2x1
jax: 0.10.0
libtpu: 0.0.40
codegen_flags: <defaults>
</compile_context>

<pallas_src>
import functools

import numpy as np
import jax
import jax.numpy as jnp
from jax.experimental import pallas as pl
from jax.experimental.pallas import tpu as pltpu


def _resconv_kernel(patch1_ref, wA_ref, w2_ref, mask_ref, gamma_ref, beta_ref,
                    out_ref, *, Cout, Wo, eps):
    """Fused resconv_basic forward.

    patch1_ref: (9*Cin, M)      im2col of padded input for the stride-s 3x3 conv
    wA_ref:     (2*Cout, 9*Cin) rows 0..Cout: conv1; rows Cout..2*Cout: 1x1 shortcut
                                (embedded at the centre tap)
    w2_ref:     (9, Cout, Cout) conv2 weights per tap, [t, c_out, c_in]
    mask_ref:   (9, M)          precomputed 0/1 validity masks (zero padding) for
                                the in-kernel stride-1 3x3 im2col
    gamma_ref:  (Cout, 3)       BN scale for stages 1, 2, 3 (columns)
    beta_ref:   (Cout, 3)       BN shift for stages 1, 2, 3 (columns)
    out_ref:    (Cout, M)       M = N*Ho*Wo, lane-dense
    """
    M = out_ref.shape[1]

    def bn(v, col):
        # Training-mode BatchNorm2d in scale/shift (FMA) form:
        #   scale = gamma * rsqrt(var + eps);  shift = beta - mean * scale
        # Uncentred variance E[v^2] - mean^2 saves a full-width (Cout, M) op per
        # stage; activations are O(1) in f32 so the cancellation error is << 2e-3.
        # NOTE: statistics assume every lane is a real element (M fills the lanes
        # exactly); a masked two-pass reduction is required once M is tiled.
        g = gamma_ref[:, col:col + 1]                       # (Cout, 1)
        b = beta_ref[:, col:col + 1]
        mean = jnp.mean(v, axis=1, keepdims=True)
        var = jnp.mean(v * v, axis=1, keepdims=True) - mean * mean
        scale = g * jax.lax.rsqrt(var + eps)
        shift = b - mean * scale
        return v * scale + shift

    def elu(v):
        # alpha = 1.  exp(min(v,0)) - 1 instead of expm1 for guaranteed Mosaic
        # lowering; the ULP-level delta near 0^- is far below tolerance.  Do not
        # "fix" to expm1 without re-checking lowering.
        return jnp.where(v > 0, v, jnp.exp(jnp.minimum(v, 0.0)) - 1.0)

    # ---- stage 1 (3x3 stride s) and the 1x1 shortcut: a single MXU matmul ----
    pre = jnp.dot(wA_ref[...], patch1_ref[...],
                  preferred_element_type=jnp.float32)        # (2*Cout, M)
    # These slices are free only because Cout is a multiple of 8 (sublane tile).
    y1 = elu(bn(pre[:Cout, :], 0))                           # conv1 -> BN1 -> ELU
    shortcut = pre[Cout:, :]                                 # conv3(x); bias cancels in BN3

    # ---- stage 2 (3x3, stride 1, pad 1) on y1 ----
    # Per tap: XLU lane rotation of y1 + precomputed 0/1 mask.  The mask zeroes
    # every lane a wrap could corrupt (valid lanes never wrap for K=3, pad=1,
    # stride=1 — re-verify if K/pad/stride of conv2 ever change).  Each masked
    # tap feeds an accumulating matmul, so patch2 is never materialized.
    y2 = None
    t = 0
    for kh in range(3):
        for kw in range(3):
            d = (kh - 1) * Wo + (kw - 1)                     # static lane shift
            is_centre = (kh == 1 and kw == 1)                # d == 0, all valid
            v = y1 if is_centre else pltpu.roll(y1, (-d) % M, axis=1)
            if not is_centre:
                v = v * mask_ref[t:t + 1, :]                 # sublane-broadcast mask
            contrib = jnp.dot(w2_ref[t], v, preferred_element_type=jnp.float32)
            y2 = contrib if y2 is None else y2 + contrib
            t += 1

    y2 = elu(bn(y2, 1))                                      # conv2 -> BN2 -> ELU

    # ---- residual add -> BN3 -> ELU, lane-dense unmasked store ----
    out_ref[...] = elu(bn(y2 + shortcut, 2)).astype(out_ref.dtype)


def resconv_basic_forward(x_nchw, params, *, stride, eps=1e-5):
    """x_nchw: (N, Cin, H, W). Returns (N, Cout, Ho, Wo)."""
    N, Cin, H, W = x_nchw.shape
    w1 = params["w1"]            # (Cout, Cin, 3, 3)
    w2 = params["w2"]            # (Cout, Cout, 3, 3)
    w3 = params["w3"]            # (Cout, Cin, 1, 1)
    Cout = w1.shape[0]
    K, pad, s = 3, 1, stride
    Ho = (H + 2 * pad - K) // s + 1
    Wo = (W + 2 * pad - K) // s + 1
    M = N * Ho * Wo

    # TODO(synk): at production shapes, fold this boundary im2col and the final
    # NCHW transpose into the kernel (or batch several residual blocks / larger N
    # per pallas_call) and tile M / Cout over a 'parallel' grid sized against the
    # 64 MiB VMEM of v7x with bf16 MXU inputs; at the current toy size the kernel
    # is launch-latency bound and these wrapper ops fuse into a couple of HLOs.
    xpad = jnp.pad(x_nchw, ((0, 0), (0, 0), (pad, pad), (pad, pad)))
    taps = [xpad[:, :, kh:kh + s * Ho:s, kw:kw + s * Wo:s]       # (N, Cin, Ho, Wo)
            for kh in range(K) for kw in range(K)]
    patch1 = jnp.stack(taps, 0)                                  # (9, N, Cin, Ho, Wo)
    patch1 = patch1.transpose(0, 2, 1, 3, 4).reshape(K * K * Cin, M)

    # conv1 weights + embedded 1x1 shortcut (centre tap) -> one (2*Cout, 9*Cin) matrix.
    w1t = jnp.transpose(w1, (0, 2, 3, 1)).reshape(Cout, K * K * Cin)
    ctr = (K // 2) * K + (K // 2)
    w3t = jnp.zeros((Cout, K * K * Cin), jnp.float32)
    w3t = w3t.at[:, ctr * Cin:(ctr + 1) * Cin].set(w3.reshape(Cout, Cin))
    wA = jnp.concatenate([w1t, w3t], axis=0)                     # (2*Cout, 9*Cin)

    # conv2 weights per tap for the accumulating matmuls: (9, Cout_out, Cout_in).
    w2taps = jnp.transpose(w2, (2, 3, 0, 1)).reshape(K * K, Cout, Cout)

    # Host-side constant validity masks (depend only on static Ho/Wo/N): removes
    # all in-kernel iota / mod / div / compare work.  4.5 KB of extra operand.
    m_idx = np.arange(M)
    ow = m_idx % Wo
    oh = (m_idx // Wo) % Ho
    mask9 = np.stack(
        [((oh + kh - 1 >= 0) & (oh + kh - 1 < Ho)
          & (ow + kw - 1 >= 0) & (ow + kw - 1 < Wo)).astype(np.float32)
         for kh in range(K) for kw in range(K)], axis=0)         # (9, M)

    gam = jnp.stack([params["g1"], params["g2"], params["g3"]], axis=1)   # (Cout, 3)
    bet = jnp.stack([params["be1"], params["be2"], params["be3"]], axis=1)

    kernel = functools.partial(_resconv_kernel, Cout=Cout, Wo=Wo, eps=eps)
    vmem = pl.BlockSpec(memory_space=pltpu.MemorySpace.VMEM)
    out = pl.pallas_call(
        kernel,
        out_shape=jax.ShapeDtypeStruct((Cout, M), jnp.float32),
        in_specs=[vmem] * 6,
        out_specs=vmem,
    )(patch1.astype(jnp.float32), wA.astype(jnp.float32),
      w2taps.astype(jnp.float32), jnp.asarray(mask9),
      gam.astype(jnp.float32), bet.astype(jnp.float32))

    # (Cout, N*Ho*Wo) -> NCHW at the boundary (reshape is free; transpose is tiny).
    return out.reshape(Cout, N, Ho, Wo).transpose(1, 0, 2, 3)


def _reference(x, params, *, stride, eps=1e-5):
    """Pure-JAX reference of the PyTorch forward (training-mode BN, ELU alpha=1)."""
    def conv2d(v, w, s, pad):
        return jax.lax.conv_general_dilated(
            v, w, window_strides=(s, s), padding=[(pad, pad), (pad, pad)],
            dimension_numbers=("NCHW", "OIHW", "NCHW"),
            precision=jax.lax.Precision.HIGHEST)

    def bn(v, g, b):
        mean = v.mean(axis=(0, 2, 3), keepdims=True)
        var = ((v - mean) ** 2).mean(axis=(0, 2, 3), keepdims=True)
        return ((v - mean) * jax.lax.rsqrt(var + eps)
                * g.reshape(1, -1, 1, 1) + b.reshape(1, -1, 1, 1))

    def elu(v):
        return jnp.where(v > 0, v, jnp.exp(jnp.minimum(v, 0.0)) - 1.0)

    y = elu(bn(conv2d(x, params["w1"], stride, 1), params["g1"], params["be1"]))
    y = elu(bn(conv2d(y, params["w2"], 1, 1), params["g2"], params["be2"]))
    sc = conv2d(x, params["w3"], stride, 0)
    return elu(bn(y + sc, params["g3"], params["be3"]))


if __name__ == "__main__":
    key = jax.random.PRNGKey(0)
    N, Cin, H, W = 2, 4, 16, 16
    Cout, stride = 8, 2

    k1, k2, k3, kx = jax.random.split(key, 4)

    def conv_init(k, shape, fan_in):                  # PyTorch kaiming_uniform(a=sqrt(5))
        b = 1.0 / fan_in ** 0.5
        return jax.random.uniform(k, shape, jnp.float32, -b, b)

    # Conv biases are omitted: a per-channel bias feeding the following
    # training-mode BatchNorm is exactly cancelled by its mean subtraction.
    params = {
        "w1": conv_init(k1, (Cout, Cin, 3, 3), Cin * 9),
        "w2": conv_init(k2, (Cout, Cout, 3, 3), Cout * 9),
        "w3": conv_init(k3, (Cout, Cin, 1, 1), Cin),
        "g1": jnp.ones((Cout,), jnp.float32), "be1": jnp.zeros((Cout,), jnp.float32),
        "g2": jnp.ones((Cout,), jnp.float32), "be2": jnp.zeros((Cout,), jnp.float32),
        "g3": jnp.ones((Cout,), jnp.float32), "be3": jnp.zeros((Cout,), jnp.float32),
    }

    x = jax.random.normal(kx, (N, Cin, H, W), jnp.float32)

    fwd = jax.jit(functools.partial(resconv_basic_forward, stride=stride))
    out = fwd(x, params)
    jax.block_until_ready(out)

    Ho = (H + 2 - 3) // stride + 1
    assert out.shape == (N, Cout, Ho, Ho), out.shape

    ref = _reference(x, params, stride=stride)
    err = float(jnp.max(jnp.abs(out - ref)))
    assert err < 2e-3, f"max abs error vs reference: {err}"

    print("KERNEL_OK")
</pallas_src>

<mosaic_0001>
module attributes {stable_mosaic.version = 11 : i64} {
  func.func @_resconv_kernel(%arg0: memref<36x128xf32, #tpu.memory_space<vmem>>, %arg1: memref<16x36xf32, #tpu.memory_space<vmem>>, %arg2: memref<9x8x8xf32, #tpu.memory_space<vmem>>, %arg3: memref<9x128xf32, #tpu.memory_space<vmem>>, %arg4: memref<8x3xf32, #tpu.memory_space<vmem>>, %arg5: memref<8x3xf32, #tpu.memory_space<vmem>>, %arg6: memref<8x128xf32, #tpu.memory_space<vmem>>) attributes {dimension_semantics = [], scalar_prefetch = 0 : i64, scratch_operands = 0 : i64, tpu.core_type = #tpu.core_type<tc>} {
    %c0 = arith.constant 0 : index
    %c0_0 = arith.constant 0 : index
    %0 = vector.load %arg1[%c0, %c0_0] : memref<16x36xf32, #tpu.memory_space<vmem>>, vector<16x36xf32>
    %c0_1 = arith.constant 0 : index
    %c0_2 = arith.constant 0 : index
    %1 = vector.load %arg0[%c0_1, %c0_2] : memref<36x128xf32, #tpu.memory_space<vmem>>, vector<36x128xf32>
    %cst = arith.constant dense<0.000000e+00> : vector<16x128xf32>
    %2 = tpu.matmul %0, %1, %cst {dimension_numbers = #tpu.dot_dimension_numbers<[1], [0], [0], [1], [0, 0, 1, 1], [], []>} : vector<16x36xf32>, vector<36x128xf32>, vector<16x128xf32> -> vector<16x128xf32>
    %3 = vector.extract_strided_slice %2 {offsets = [0, 0], sizes = [8, 128], strides = [1, 1]} : vector<16x128xf32> to vector<8x128xf32>
    %c0_3 = arith.constant 0 : index
    %c0_4 = arith.constant 0 : index
    %4 = vector.load %arg4[%c0_3, %c0_4] : memref<8x3xf32, #tpu.memory_space<vmem>>, vector<8x1xf32>
    %c0_5 = arith.constant 0 : index
    %c0_6 = arith.constant 0 : index
    %5 = vector.load %arg5[%c0_5, %c0_6] : memref<8x3xf32, #tpu.memory_space<vmem>>, vector<8x1xf32>
    %cst_7 = arith.constant dense<0.000000e+00> : vector<8xf32>
    %6 = vector.multi_reduction <add>, %3, %cst_7 [1] : vector<8x128xf32> to vector<8xf32>
    %7 = vector.shape_cast %6 : vector<8xf32> to vector<8x1xf32>
    %cst_8 = arith.constant 1.280000e+02 : f32
    %8 = vector.broadcast %cst_8 : f32 to vector<8x1xf32>
    %9 = arith.divf %7, %8 : vector<8x1xf32>
    %10 = arith.mulf %3, %3 : vector<8x128xf32>
    %cst_9 = arith.constant dense<0.000000e+00> : vector<8xf32>
    %11 = vector.multi_reduction <add>, %10, %cst_9 [1] : vector<8x128xf32> to vector<8xf32>
    %12 = vector.shape_cast %11 : vector<8xf32> to vector<8x1xf32>
    %cst_10 = arith.constant 1.280000e+02 : f32
    %13 = vector.broadcast %cst_10 : f32 to vector<8x1xf32>
    %14 = arith.divf %12, %13 : vector<8x1xf32>
    %15 = arith.mulf %9, %9 : vector<8x1xf32>
    %16 = arith.subf %14, %15 : vector<8x1xf32>
    %cst_11 = arith.constant 9.99999974E-6 : f32
    %17 = vector.broadcast %cst_11 : f32 to vector<8x1xf32>
    %18 = arith.addf %16, %17 : vector<8x1xf32>
    %19 = math.rsqrt %18 : vector<8x1xf32>
    %20 = arith.mulf %4, %19 : vector<8x1xf32>
    %21 = arith.mulf %9, %20 : vector<8x1xf32>
    %22 = arith.subf %5, %21 : vector<8x1xf32>
    %23 = vector.broadcast %20 : vector<8x1xf32> to vector<8x128xf32>
    %24 = arith.mulf %3, %23 : vector<8x128xf32>
    %25 = vector.broadcast %22 : vector<8x1xf32> to vector<8x128xf32>
    %26 = arith.addf %24, %25 : vector<8x128xf32>
    %cst_12 = arith.constant 0.000000e+00 : f32
    %27 = vector.broadcast %cst_12 : f32 to vector<8x128xf32>
    %28 = arith.cmpf ogt, %26, %27 : vector<8x128xf32>
    %cst_13 = arith.constant 0.000000e+00 : f32
    %29 = vector.broadcast %cst_13 : f32 to vector<8x128xf32>
    %30 = arith.minimumf %26, %29 : vector<8x128xf32>
    %31 = math.exp %30 : vector<8x128xf32>
    %cst_14 = arith.constant 1.000000e+00 : f32
    %32 = vector.broadcast %cst_14 : f32 to vector<8x128xf32>
    %33 = arith.subf %31, %32 : vector<8x128xf32>
    %34 = arith.select %28, %26, %33 : vector<8x128xi1>, vector<8x128xf32>
    %35 = vector.extract_strided_slice %2 {offsets = [8, 0], sizes = [8, 128], strides = [1, 1]} : vector<16x128xf32> to vector<8x128xf32>
    %c9_i32 = arith.constant 9 : i32
    %36 = tpu.dynamic_rotate %34 by %c9_i32 dim 1 : vector<8x128xf32>, i32 -> vector<8x128xf32>
    %c0_15 = arith.constant 0 : index
    %c0_16 = arith.constant 0 : index
    %37 = vector.load %arg3[%c0_15, %c0_16] : memref<9x128xf32, #tpu.memory_space<vmem>>, vector<1x128xf32>
    %38 = vector.broadcast %37 : vector<1x128xf32> to vector<8x128xf32>
    %39 = arith.mulf %36, %38 : vector<8x128xf32>
    %c0_17 = arith.constant 0 : index
    %c0_18 = arith.constant 0 : index
    %c0_19 = arith.constant 0 : index
    %40 = vector.load %arg2[%c0_17, %c0_18, %c0_19] : memref<9x8x8xf32, #tpu.memory_space<vmem>>, vector<1x8x8xf32>
    %41 = vector.shape_cast %40 : vector<1x8x8xf32> to vector<8x8xf32>
    %cst_20 = arith.constant dense<0.000000e+00> : vector<8x128xf32>
    %42 = tpu.matmul %41, %39, %cst_20 {dimension_numbers = #tpu.dot_dimension_numbers<[1], [0], [0], [1], [0, 0, 1, 1], [], []>} : vector<8x8xf32>, vector<8x128xf32>, vector<8x128xf32> -> vector<8x128xf32>
    %c8_i32 = arith.constant 8 : i32
    %43 = tpu.dynamic_rotate %34 by %c8_i32 dim 1 : vector<8x128xf32>, i32 -> vector<8x128xf32>
    %c1 = arith.constant 1 : index
    %c0_21 = arith.constant 0 : index
    %44 = vector.load %arg3[%c1, %c0_21] : memref<9x128xf32, #tpu.memory_space<vmem>>, vector<1x128xf32>
    %45 = vector.broadcast %44 : vector<1x128xf32> to vector<8x128xf32>
    %46 = arith.mulf %43, %45 : vector<8x128xf32>
    %c1_22 = arith.constant 1 : index
    %c0_23 = arith.constant 0 : index
    %c0_24 = arith.constant 0 : index
    %47 = vector.load %arg2[%c1_22, %c0_23, %c0_24] : memref<9x8x8xf32, #tpu.memory_space<vmem>>, vector<1x8x8xf32>
    %48 = vector.shape_cast %47 : vector<1x8x8xf32> to vector<8x8xf32>
    %cst_25 = arith.constant dense<0.000000e+00> : vector<8x128xf32>
    %49 = tpu.matmul %48, %46, %cst_25 {dimension_numbers = #tpu.dot_dimension_numbers<[1], [0], [0], [1], [0, 0, 1, 1], [], []>} : vector<8x8xf32>, vector<8x128xf32>, vector<8x128xf32> -> vector<8x128xf32>
    %50 = arith.addf %42, %49 : vector<8x128xf32>
    %c7_i32 = arith.constant 7 : i32
    %51 = tpu.dynamic_rotate %34 by %c7_i32 dim 1 : vector<8x128xf32>, i32 -> vector<8x128xf32>
    %c2 = arith.constant 2 : index
    %c0_26 = arith.constant 0 : index
    %52 = vector.load %arg3[%c2, %c0_26] : memref<9x128xf32, #tpu.memory_space<vmem>>, vector<1x128xf32>
    %53 = vector.broadcast %52 : vector<1x128xf32> to vector<8x128xf32>
    %54 = arith.mulf %51, %53 : vector<8x128xf32>
    %c2_27 = arith.constant 2 : index
    %c0_28 = arith.constant 0 : index
    %c0_29 = arith.constant 0 : index
    %55 = vector.load %arg2[%c2_27, %c0_28, %c0_29] : memref<9x8x8xf32, #tpu.memory_space<vmem>>, vector<1x8x8xf32>
    %56 = vector.shape_cast %55 : vector<1x8x8xf32> to vector<8x8xf32>
    %cst_30 = arith.constant dense<0.000000e+00> : vector<8x128xf32>
    %57 = tpu.matmul %56, %54, %cst_30 {dimension_numbers = #tpu.dot_dimension_numbers<[1], [0], [0], [1], [0, 0, 1, 1], [], []>} : vector<8x8xf32>, vector<8x128xf32>, vector<8x128xf32> -> vector<8x128xf32>
    %58 = arith.addf %50, %57 : vector<8x128xf32>
    %c1_i32 = arith.constant 1 : i32
    %59 = tpu.dynamic_rotate %34 by %c1_i32 dim 1 : vector<8x128xf32>, i32 -> vector<8x128xf32>
    %c3 = arith.constant 3 : index
    %c0_31 = arith.constant 0 : index
    %60 = vector.load %arg3[%c3, %c0_31] : memref<9x128xf32, #tpu.memory_space<vmem>>, vector<1x128xf32>
    %61 = vector.broadcast %60 : vector<1x128xf32> to vector<8x128xf32>
    %62 = arith.mulf %59, %61 : vector<8x128xf32>
    %c3_32 = arith.constant 3 : index
    %c0_33 = arith.constant 0 : index
    %c0_34 = arith.constant 0 : index
    %63 = vector.load %arg2[%c3_32, %c0_33, %c0_34] : memref<9x8x8xf32, #tpu.memory_space<vmem>>, vector<1x8x8xf32>
    %64 = vector.shape_cast %63 : vector<1x8x8xf32> to vector<8x8xf32>
    %cst_35 = arith.constant dense<0.000000e+00> : vector<8x128xf32>
    %65 = tpu.matmul %64, %62, %cst_35 {dimension_numbers = #tpu.dot_dimension_numbers<[1], [0], [0], [1], [0, 0, 1, 1], [], []>} : vector<8x8xf32>, vector<8x128xf32>, vector<8x128xf32> -> vector<8x128xf32>
    %66 = arith.addf %58, %65 : vector<8x128xf32>
    %c4 = arith.constant 4 : index
    %c0_36 = arith.constant 0 : index
    %c0_37 = arith.constant 0 : index
    %67 = vector.load %arg2[%c4, %c0_36, %c0_37] : memref<9x8x8xf32, #tpu.memory_space<vmem>>, vector<1x8x8xf32>
    %68 = vector.shape_cast %67 : vector<1x8x8xf32> to vector<8x8xf32>
    %cst_38 = arith.constant dense<0.000000e+00> : vector<8x128xf32>
    %69 = tpu.matmul %68, %34, %cst_38 {dimension_numbers = #tpu.dot_dimension_numbers<[1], [0], [0], [1], [0, 0, 1, 1], [], []>} : vector<8x8xf32>, vector<8x128xf32>, vector<8x128xf32> -> vector<8x128xf32>
    %70 = arith.addf %66, %69 : vector<8x128xf32>
    %c127_i32 = arith.constant 127 : i32
    %71 = tpu.dynamic_rotate %34 by %c127_i32 dim 1 : vector<8x128xf32>, i32 -> vector<8x128xf32>
    %c5 = arith.constant 5 : index
    %c0_39 = arith.constant 0 : index
    %72 = vector.load %arg3[%c5, %c0_39] : memref<9x128xf32, #tpu.memory_space<vmem>>, vector<1x128xf32>
    %73 = vector.broadcast %72 : vector<1x128xf32> to vector<8x128xf32>
    %74 = arith.mulf %71, %73 : vector<8x128xf32>
    %c5_40 = arith.constant 5 : index
    %c0_41 = arith.constant 0 : index
    %c0_42 = arith.constant 0 : index
    %75 = vector.load %arg2[%c5_40, %c0_41, %c0_42] : memref<9x8x8xf32, #tpu.memory_space<vmem>>, vector<1x8x8xf32>
    %76 = vector.shape_cast %75 : vector<1x8x8xf32> to vector<8x8xf32>
    %cst_43 = arith.constant dense<0.000000e+00> : vector<8x128xf32>
    %77 = tpu.matmul %76, %74, %cst_43 {dimension_numbers = #tpu.dot_dimension_numbers<[1], [0], [0], [1], [0, 0, 1, 1], [], []>} : vector<8x8xf32>, vector<8x128xf32>, vector<8x128xf32> -> vector<8x128xf32>
    %78 = arith.addf %70, %77 : vector<8x128xf32>
    %c121_i32 = arith.constant 121 : i32
    %79 = tpu.dynamic_rotate %34 by %c121_i32 dim 1 : vector<8x128xf32>, i32 -> vector<8x128xf32>
    %c6 = arith.constant 6 : index
    %c0_44 = arith.constant 0 : index
    %80 = vector.load %arg3[%c6, %c0_44] : memref<9x128xf32, #tpu.memory_space<vmem>>, vector<1x128xf32>
    %81 = vector.broadcast %80 : vector<1x128xf32> to vector<8x128xf32>
    %82 = arith.mulf %79, %81 : vector<8x128xf32>
    %c6_45 = arith.constant 6 : index
    %c0_46 = arith.constant 0 : index
    %c0_47 = arith.constant 0 : index
    %83 = vector.load %arg2[%c6_45, %c0_46, %c0_47] : memref<9x8x8xf32, #tpu.memory_space<vmem>>, vector<1x8x8xf32>
    %84 = vector.shape_cast %83 : vector<1x8x8xf32> to vector<8x8xf32>
    %cst_48 = arith.constant dense<0.000000e+00> : vector<8x128xf32>
    %85 = tpu.matmul %84, %82, %cst_48 {dimension_numbers = #tpu.dot_dimension_numbers<[1], [0], [0], [1], [0, 0, 1, 1], [], []>} : vector<8x8xf32>, vector<8x128xf32>, vector<8x128xf32> -> vector<8x128xf32>
    %86 = arith.addf %78, %85 : vector<8x128xf32>
    %c120_i32 = arith.constant 120 : i32
    %87 = tpu.dynamic_rotate %34 by %c120_i32 dim 1 : vector<8x128xf32>, i32 -> vector<8x128xf32>
    %c7 = arith.constant 7 : index
    %c0_49 = arith.constant 0 : index
    %88 = vector.load %arg3[%c7, %c0_49] : memref<9x128xf32, #tpu.memory_space<vmem>>, vector<1x128xf32>
    %89 = vector.broadcast %88 : vector<1x128xf32> to vector<8x128xf32>
    %90 = arith.mulf %87, %89 : vector<8x128xf32>
    %c7_50 = arith.constant 7 : index
    %c0_51 = arith.constant 0 : index
    %c0_52 = arith.constant 0 : index
    %91 = vector.load %arg2[%c7_50, %c0_51, %c0_52] : memref<9x8x8xf32, #tpu.memory_space<vmem>>, vector<1x8x8xf32>
    %92 = vector.shape_cast %91 : vector<1x8x8xf32> to vector<8x8xf32>
    %cst_53 = arith.constant dense<0.000000e+00> : vector<8x128xf32>
    %93 = tpu.matmul %92, %90, %cst_53 {dimension_numbers = #tpu.dot_dimension_numbers<[1], [0], [0], [1], [0, 0, 1, 1], [], []>} : vector<8x8xf32>, vector<8x128xf32>, vector<8x128xf32> -> vector<8x128xf32>
    %94 = arith.addf %86, %93 : vector<8x128xf32>
    %c119_i32 = arith.constant 119 : i32
    %95 = tpu.dynamic_rotate %34 by %c119_i32 dim 1 : vector<8x128xf32>, i32 -> vector<8x128xf32>
    %c8 = arith.constant 8 : index
    %c0_54 = arith.constant 0 : index
    %96 = vector.load %arg3[%c8, %c0_54] : memref<9x128xf32, #tpu.memory_space<vmem>>, vector<1x128xf32>
    %97 = vector.broadcast %96 : vector<1x128xf32> to vector<8x128xf32>
    %98 = arith.mulf %95, %97 : vector<8x128xf32>
    %c8_55 = arith.constant 8 : index
    %c0_56 = arith.constant 0 : index
    %c0_57 = arith.constant 0 : index
    %99 = vector.load %arg2[%c8_55, %c0_56, %c0_57] : memref<9x8x8xf32, #tpu.memory_space<vmem>>, vector<1x8x8xf32>
    %100 = vector.shape_cast %99 : vector<1x8x8xf32> to vector<8x8xf32>
    %cst_58 = arith.constant dense<0.000000e+00> : vector<8x128xf32>
    %101 = tpu.matmul %100, %98, %cst_58 {dimension_numbers = #tpu.dot_dimension_numbers<[1], [0], [0], [1], [0, 0, 1, 1], [], []>} : vector<8x8xf32>, vector<8x128xf32>, vector<8x128xf32> -> vector<8x128xf32>
    %102 = arith.addf %94, %101 : vector<8x128xf32>
    %c0_59 = arith.constant 0 : index
    %c1_60 = arith.constant 1 : index
    %103 = vector.load %arg4[%c0_59, %c1_60] : memref<8x3xf32, #tpu.memory_space<vmem>>, vector<8x1xf32>
    %c0_61 = arith.constant 0 : index
    %c1_62 = arith.constant 1 : index
    %104 = vector.load %arg5[%c0_61, %c1_62] : memref<8x3xf32, #tpu.memory_space<vmem>>, vector<8x1xf32>
    %cst_63 = arith.constant dense<0.000000e+00> : vector<8xf32>
    %105 = vector.multi_reduction <add>, %102, %cst_63 [1] : vector<8x128xf32> to vector<8xf32>
    %106 = vector.shape_cast %105 : vector<8xf32> to vector<8x1xf32>
    %cst_64 = arith.constant 1.280000e+02 : f32
    %107 = vector.broadcast %cst_64 : f32 to vector<8x1xf32>
    %108 = arith.divf %106, %107 : vector<8x1xf32>
    %109 = arith.mulf %102, %102 : vector<8x128xf32>
    %cst_65 = arith.constant dense<0.000000e+00> : vector<8xf32>
    %110 = vector.multi_reduction <add>, %109, %cst_65 [1] : vector<8x128xf32> to vector<8xf32>
    %111 = vector.shape_cast %110 : vector<8xf32> to vector<8x1xf32>
    %cst_66 = arith.constant 1.280000e+02 : f32
    %112 = vector.broadcast %cst_66 : f32 to vector<8x1xf32>
    %113 = arith.divf %111, %112 : vector<8x1xf32>
    %114 = arith.mulf %108, %108 : vector<8x1xf32>
    %115 = arith.subf %113, %114 : vector<8x1xf32>
    %cst_67 = arith.constant 9.99999974E-6 : f32
    %116 = vector.broadcast %cst_67 : f32 to vector<8x1xf32>
    %117 = arith.addf %115, %116 : vector<8x1xf32>
    %118 = math.rsqrt %117 : vector<8x1xf32>
    %119 = arith.mulf %103, %118 : vector<8x1xf32>
    %120 = arith.mulf %108, %119 : vector<8x1xf32>
    %121 = arith.subf %104, %120 : vector<8x1xf32>
    %122 = vector.broadcast %119 : vector<8x1xf32> to vector<8x128xf32>
    %123 = arith.mulf %102, %122 : vector<8x128xf32>
    %124 = vector.broadcast %121 : vector<8x1xf32> to vector<8x128xf32>
    %125 = arith.addf %123, %124 : vector<8x128xf32>
    %cst_68 = arith.constant 0.000000e+00 : f32
    %126 = vector.broadcast %cst_68 : f32 to vector<8x128xf32>
    %127 = arith.cmpf ogt, %125, %126 : vector<8x128xf32>
    %cst_69 = arith.constant 0.000000e+00 : f32
    %128 = vector.broadcast %cst_69 : f32 to vector<8x128xf32>
    %129 = arith.minimumf %125, %128 : vector<8x128xf32>
    %130 = math.exp %129 : vector<8x128xf32>
    %cst_70 = arith.constant 1.000000e+00 : f32
    %131 = vector.broadcast %cst_70 : f32 to vector<8x128xf32>
    %132 = arith.subf %130, %131 : vector<8x128xf32>
    %133 = arith.select %127, %125, %132 : vector<8x128xi1>, vector<8x128xf32>
    %134 = arith.addf %133, %35 : vector<8x128xf32>
    %c0_71 = arith.constant 0 : index
    %c2_72 = arith.constant 2 : index
    %135 = vector.load %arg4[%c0_71, %c2_72] : memref<8x3xf32, #tpu.memory_space<vmem>>, vector<8x1xf32>
    %c0_73 = arith.constant 0 : index
    %c2_74 = arith.constant 2 : index
    %136 = vector.load %arg5[%c0_73, %c2_74] : memref<8x3xf32, #tpu.memory_space<vmem>>, vector<8x1xf32>
    %cst_75 = arith.constant dense<0.000000e+00> : vector<8xf32>
    %137 = vector.multi_reduction <add>, %134, %cst_75 [1] : vector<8x128xf32> to vector<8xf32>
    %138 = vector.shape_cast %137 : vector<8xf32> to vector<8x1xf32>
    %cst_76 = arith.constant 1.280000e+02 : f32
    %139 = vector.broadcast %cst_76 : f32 to vector<8x1xf32>
    %140 = arith.divf %138, %139 : vector<8x1xf32>
    %141 = arith.mulf %134, %134 : vector<8x128xf32>
    %cst_77 = arith.constant dense<0.000000e+00> : vector<8xf32>
    %142 = vector.multi_reduction <add>, %141, %cst_77 [1] : vector<8x128xf32> to vector<8xf32>
    %143 = vector.shape_cast %142 : vector<8xf32> to vector<8x1xf32>
    %cst_78 = arith.constant 1.280000e+02 : f32
    %144 = vector.broadcast %cst_78 : f32 to vector<8x1xf32>
    %145 = arith.divf %143, %144 : vector<8x1xf32>
    %146 = arith.mulf %140, %140 : vector<8x1xf32>
    %147 = arith.subf %145, %146 : vector<8x1xf32>
    %cst_79 = arith.constant 9.99999974E-6 : f32
    %148 = vector.broadcast %cst_79 : f32 to vector<8x1xf32>
    %149 = arith.addf %147, %148 : vector<8x1xf32>
    %150 = math.rsqrt %149 : vector<8x1xf32>
    %151 = arith.mulf %135, %150 : vector<8x1xf32>
    %152 = arith.mulf %140, %151 : vector<8x1xf32>
    %153 = arith.subf %136, %152 : vector<8x1xf32>
    %154 = vector.broadcast %151 : vector<8x1xf32> to vector<8x128xf32>
    %155 = arith.mulf %134, %154 : vector<8x128xf32>
    %156 = vector.broadcast %153 : vector<8x1xf32> to vector<8x128xf32>
    %157 = arith.addf %155, %156 : vector<8x128xf32>
    %cst_80 = arith.constant 0.000000e+00 : f32
    %158 = vector.broadcast %cst_80 : f32 to vector<8x128xf32>
    %159 = arith.cmpf ogt, %157, %158 : vector<8x128xf32>
    %cst_81 = arith.constant 0.000000e+00 : f32
    %160 = vector.broadcast %cst_81 : f32 to vector<8x128xf32>
    %161 = arith.minimumf %157, %160 : vector<8x128xf32>
    %162 = math.exp %161 : vector<8x128xf32>
    %cst_82 = arith.constant 1.000000e+00 : f32
    %163 = vector.broadcast %cst_82 : f32 to vector<8x128xf32>
    %164 = arith.subf %162, %163 : vector<8x128xf32>
    %165 = arith.select %159, %157, %164 : vector<8x128xi1>, vector<8x128xf32>
    %c0_83 = arith.constant 0 : index
    %c0_84 = arith.constant 0 : index
    %166 = vector.load %arg6[%c0_83, %c0_84] : memref<8x128xf32, #tpu.memory_space<vmem>>, vector<8x128xf32>
    tpu.vector_store %arg6[%c0_83, %c0_84], %165 {strides = array<i32>} : memref<8x128xf32, #tpu.memory_space<vmem>>, vector<8x128xf32>,
    return
  }
}

</mosaic_0001>

<llo_original>
// kernel: resconv_basic_forward.1
$region0: #{resconv_basic_forward.1}
  #allocation0 [shape = 'u32[]', space=smem, size = 0x4, offset = 0x4, fixed_abs, tag = 'smem constant byte address 0x4 - core index']
  #allocation1 [shape = 'u32[144,128]{1,0:T(1,128)}', space=vmem, size = 0x12000, scoped, tag = 'internal scratch']
  %s0 = inlined_call_operand.vmem [shape: f32[36,128], index: 0, kind: input, shape index: {}]
  %s1 = inlined_call_operand.vmem [shape: f32[16,36], index: 1, kind: input, shape index: {}]
  %s2 = inlined_call_operand.vmem [shape: f32[9,8,8], index: 2, kind: input, shape index: {}]
  %s3 = inlined_call_operand.vmem [shape: f32[9,128], index: 3, kind: input, shape index: {}]
  %s4 = inlined_call_operand.vmem [shape: f32[8,3], index: 4, kind: input, shape index: {}]
  %s5 = inlined_call_operand.vmem [shape: f32[8,3], index: 5, kind: input, shape index: {}]
  %s6 = inlined_call_operand.vmem [shape: f32[8,128], index: 6, kind: output, shape index: {}]
  %s7 = sld [smem:[#allocation0]]
  $region34: #{resconv_basic_forward.1} parent=0
    _
  %s9 = ssub.s32 1, %s7
  %s10 = scalar_select 0, %s9, %s7
  // Predicated region
  $region2: #{resconv_basic_forward.1} parent=0 // pred_check
    _
  $region3: #{resconv_basic_forward.1} parent=0 // pred_check_branch
    %12 = sbr.rel (0) target = $region5
  $region4: #{resconv_basic_forward.1} parent=0 // pred_region
    _
  $region5: #{resconv_basic_forward.1} parent=0 // pred_fallthru
    _
  // Predicated region
  $region6: #{resconv_basic_forward.1} parent=0 // pred_check
    _
  $region7: #{resconv_basic_forward.1} parent=0 // pred_check_branch
    %14 = sbr.rel (0) target = $region9
  $region8: #{resconv_basic_forward.1} parent=0 // pred_region
    _
  $region9: #{resconv_basic_forward.1} parent=0 // pred_fallthru
    _
  // Predicated region
  $region10: #{resconv_basic_forward.1} parent=0 // pred_check
    _
  $region11: #{resconv_basic_forward.1} parent=0 // pred_check_branch
    %16 = sbr.rel (0) target = $region13
  $region12: #{resconv_basic_forward.1} parent=0 // pred_region
    _
  $region13: #{resconv_basic_forward.1} parent=0 // pred_fallthru
    _
  // Predicated region
  $region14: #{resconv_basic_forward.1} parent=0 // pred_check
    _
  $region15: #{resconv_basic_forward.1} parent=0 // pred_check_branch
    %18 = sbr.rel (0) target = $region17
  $region16: #{resconv_basic_forward.1} parent=0 // pred_region
    _
  $region17: #{resconv_basic_forward.1} parent=0 // pred_fallthru
    _
  // Predicated region
  $region18: #{resconv_basic_forward.1} parent=0 // pred_check
    _
  $region19: #{resconv_basic_forward.1} parent=0 // pred_check_branch
    %20 = sbr.rel (0) target = $region21
  $region20: #{resconv_basic_forward.1} parent=0 // pred_region
    _
  $region21: #{resconv_basic_forward.1} parent=0 // pred_fallthru
    _
  // Predicated region
  $region22: #{resconv_basic_forward.1} parent=0 // pred_check
    _
  $region23: #{resconv_basic_forward.1} parent=0 // pred_check_branch
    %22 = sbr.rel (0) target = $region25
  $region24: #{resconv_basic_forward.1} parent=0 // pred_region
    _
  $region25: #{resconv_basic_forward.1} parent=0 // pred_fallthru
    _
  %v23 = vld [vmem:[%s1] sm:$0xff]
  %v24 = vld [vmem:[%s1 + $0x8] sm:$0xff]
  %v25 = vld [vmem:[%s0] sm:$0xff]
  %v26 = vld [vmem:[%s0 + $0x8] sm:$0xff]
  %v27 = vld [vmem:[%s0 + $0x10] sm:$0xff]
  %v28 = vld [vmem:[%s0 + $0x18] sm:$0xff]
  %v29 = vld [vmem:[%s0 + $0x20] sm:$0xf]
  %vm30 = vcmask 293888
  %v32 = vsel %vm30, %v23, 0
  %v35 = vsel %vm30, %v24, 0
  %vm37 = vcmask 1043456
  %v39 = vsel %vm37, %v29, 0
  %41 = vmatprep.subr.mxu0 0.0
  %42 = vmatpush1.msra.mxu0 %v25
  %43 = vmatprep.subr.mxu0 0.0
  %44 = vmatpush1.msra.mxu0 %v26
  %45 = vmatprep.subr.mxu0 0.0
  %46 = vmatpush1.msra.mxu0 %v27
  %47 = vmatprep.subr.mxu0 0.0
  %48 = vmatpush1.msra.mxu0 %v28
  %49 = vmatprep.subr.mxu0 0.0
  %50 = vmatpush1.msra.mxu0 %v39
  %51 = vmatprep.subr.mxu0 0.0
  %52 = vmatpush1.msra.mxu0 0.0
  %53 = vmatprep.subr.mxu0 0.0
  %54 = vmatpush1.msra.mxu0 0.0
  %55 = vmatprep.subr.mxu0 0.0
  %56 = vmatpush1.msra.mxu0 0.0
  %57 = vmatprep.subr.mxu0 0.0
  %58 = vmatpush1.msra.mxu0 0.0
  %59 = vmatprep.subr.mxu0 0.0
  %60 = vmatpush1.msra.mxu0 0.0
  %61 = vmatprep.subr.mxu0 0.0
  %62 = vmatpush1.msra.mxu0 0.0
  %63 = vmatprep.subr.mxu0 0.0
  %64 = vmatpush1.msra.mxu0 0.0
  %65 = vmatprep.subr.mxu0 0.0
  %66 = vmatpush1.msra.mxu0 0.0
  %67 = vmatprep.subr.mxu0 0.0
  %68 = vmatpush1.msra.mxu0 0.0
  %69 = vmatprep.subr.mxu0 0.0
  %70 = vmatpush1.msra.mxu0 0.0
  %71 = vmatprep.subr.mxu0 0.0
  %72 = vmatpush1.msra.mxu0 0.0
  %73 = vmatprep.subr.mxu0 0.0
  %74 = vmatpush1.msra.mxu0 0.0
  %75 = vmatprep.subr.mxu0 0.0
  %76 = vmatpush1.msra.mxu0 0.0
  %77 = vmatprep.subr.mxu0 0.0
  %78 = vmatpush1.msra.mxu0 0.0
  %79 = vmatprep.subr.mxu0 0.0
  %80 = vmatpush1.msra.mxu0 0.0
  %81 = vmatprep.subr.mxu0 0.0
  %82 = vmatpush1.msra.mxu0 0.0
  %83 = vmatprep.subr.mxu0 0.0
  %84 = vmatpush1.msra.mxu0 0.0
  %85 = vmatprep.subr.mxu0 0.0
  %86 = vmatpush1.msra.mxu0 0.0
  %87 = vmatprep.subr.mxu0 0.0
  %88 = vmatpush1.msra.mxu0 0.0
  %89 = vmatprep.subr.mxu0 0.0
  %90 = vmatpush1.msra.mxu0 0.0
  %91 = vmatprep.subr.mxu0 0.0
  %92 = vmatpush1.msra.mxu0 0.0
  %93 = vmatprep.subr.mxu0 0.0
  %94 = vmatpush1.msra.mxu0 0.0
  %95 = vmatprep.subr.mxu0 0.0
  %96 = vmatpush1.msra.mxu0 0.0
  %97 = vmatprep.subr.mxu0 0.0
  %98 = vmatpush1.msra.mxu0 0.0
  %99 = vmatprep.subr.mxu0 0.0
  %100 = vmatpush1.msra.mxu0 0.0
  %101 = vmatprep.subr.mxu0 0.0
  %102 = vmatpush1.msra.mxu0 0.0
  %103 = vmatprep.subr.mxu0 0.0
  %104 = vmatpush1.msra.mxu0 0.0
  %105 = vmatprep.mubr.f32.mxu0 0.0
  %106 = vmatmul.mubr.f32.gmra.mrb[0].mxu0 %v32
  %v107 = vpop.f32.mrb[0].mxu0
  %v108 = vadd.f32 0.0, %v107
  %v109 = vpop.f32.mrb[0].mxu0
  %110 = vmatprep.mubr.f32.mxu0 0.0
  %111 = vmatmul.mubr.f32.gmra.mrb[0].mxu0 %v35
  %v112 = vpop.f32.mrb[0].mxu0
  %v113 = vadd.f32 0.0, %v112
  %v114 = vpop.f32.mrb[0].mxu0
  %115 = vdwg.mxu0
  %v116 = vld [vmem:[%s4] sm:$0xff]
  %v117 = vld [vmem:[%s5] sm:$0xff]
  %118 = vadd.xlane.f32.xlu0 %v108
  %v119 = vpop.xlane.xlu0 %118
  %v120 = vrcp.pop 128.0
  %v121 = vmul.f32 %v119, %v120
  %v122 = vmul.f32 %v108, %v108
  %123 = vadd.xlane.f32.xlu0 %v122
  %v124 = vpop.xlane.xlu0 %123
  %v125 = vmul.f32 %v124, %v120
  %v126 = vmul.f32 %v121, %v121
  %v127 = vsub.f32 %v125, %v126
  %v128 = vadd.f32 %v127, 1e-05
  %v129 = vrsqrt.pop %v128
  %v130 = vmul.f32 %v116, %v129
  %v131 = vmul.f32 %v121, %v130
  %v132 = vsub.f32 %v117, %v131
  %134 = vset.pattern.permute.xlu0 0
  %135 = vperm.xlu0 %134, %v130
  %v136 = vpop.permute.xlu0 %135
  %v138 = vmul.f32 %v108, %v136
  %140 = vset.pattern.permute.xlu0 0
  %141 = vperm.xlu0 %140, %v132
  %v142 = vpop.permute.xlu0 %141
  %v144 = vadd.f32 %v138, %v142
  %vm145 = vcmp.gt.f32.partialorder %v144, 0.0
  %v146 = vmin.f32 %v144, 0.0
  %v147 = vmul.f32 %v146, 1.442695
  %v148 = vpow.pop %v147
  %v149 = vsub.f32 %v148, 1.0
  %v150 = vsel %vm145, %v144, %v149
  %151 = vrot.lane.b32.xlu0 %v150, 9
  %v152 = vpop.permute.xlu0 %151
  %v153 = vld [vmem:[%s3] sm:$0x1]
  %v154 = vlaneseq
  %v155 = vshrl.u32 %v154, 7
  %v156 = vsub.s32 0, %v155
  %v157 = vrot.slane %v153, %v156
  %v158 = vmul.f32 %v152, %v157
  %v159 = vld [vmem:[%s2] sm:$0xff]
  %160 = vrot.lane.b32.xlu0 %v150, 8
  %v161 = vpop.permute.xlu0 %160
  %v162 = vld [vmem:[%s3 + $0x1] sm:$0x1]
  %v163 = vlaneseq
  %v164 = vshrl.u32 %v163, 7
  %v165 = vsub.s32 0, %v164
  %v166 = vrot.slane %v162, %v165
  %v167 = vmul.f32 %v161, %v166
  %s168 = scalar_lea.vmem %s2, 8
  %v169 = vld [vmem:[%s168] sm:$0xff]
  %vm170 = vcmask 64512
  %v172 = vsel %vm170, %v169, 0
  %174 = vmatprep.subr.mxu0 0.0
  %175 = vmatpush1.msra.mxu0 %v167
  %176 = vmatprep.subr.mxu0 0.0
  %177 = vmatpush1.msra.mxu0 0.0
  %178 = vmatprep.subr.mxu0 0.0
  %179 = vmatpush1.msra.mxu0 0.0
  %180 = vmatprep.subr.mxu0 0.0
  %181 = vmatpush1.msra.mxu0 0.0
  %182 = vmatprep.subr.mxu0 0.0
  %183 = vmatpush1.msra.mxu0 0.0
  %184 = vmatprep.subr.mxu0 0.0
  %185 = vmatpush1.msra.mxu0 0.0
  %186 = vmatprep.subr.mxu0 0.0
  %187 = vmatpush1.msra.mxu0 0.0
  %188 = vmatprep.subr.mxu0 0.0
  %189 = vmatpush1.msra.mxu0 0.0
  %190 = vmatprep.subr.mxu0 0.0
  %191 = vmatpush1.msra.mxu0 0.0
  %192 = vmatprep.subr.mxu0 0.0
  %193 = vmatpush1.msra.mxu0 0.0
  %194 = vmatprep.subr.mxu0 0.0
  %195 = vmatpush1.msra.mxu0 0.0
  %196 = vmatprep.subr.mxu0 0.0
  %197 = vmatpush1.msra.mxu0 0.0
  %198 = vmatprep.subr.mxu0 0.0
  %199 = vmatpush1.msra.mxu0 0.0
  %200 = vmatprep.subr.mxu0 0.0
  %201 = vmatpush1.msra.mxu0 0.0
  %202 = vmatprep.subr.mxu0 0.0
  %203 = vmatpush1.msra.mxu0 0.0
  %204 = vmatprep.subr.mxu0 0.0
  %205 = vmatpush1.msra.mxu0 0.0
  %206 = vmatprep.subr.mxu0 0.0
  %207 = vmatpush1.msra.mxu0 0.0
  %208 = vmatprep.subr.mxu0 0.0
  %209 = vmatpush1.msra.mxu0 0.0
  %210 = vmatprep.subr.mxu0 0.0
  %211 = vmatpush1.msra.mxu0 0.0
  %212 = vmatprep.subr.mxu0 0.0
  %213 = vmatpush1.msra.mxu0 0.0
  %214 = vmatprep.subr.mxu0 0.0
  %215 = vmatpush1.msra.mxu0 0.0
  %216 = vmatprep.subr.mxu0 0.0
  %217 = vmatpush1.msra.mxu0 0.0
  %218 = vmatprep.subr.mxu0 0.0
  %219 = vmatpush1.msra.mxu0 0.0
  %220 = vmatprep.subr.mxu0 0.0
  %221 = vmatpush1.msra.mxu0 0.0
  %222 = vmatprep.subr.mxu0 0.0
  %223 = vmatpush1.msra.mxu0 0.0
  %224 = vmatprep.subr.mxu0 0.0
  %225 = vmatpush1.msra.mxu0 0.0
  %226 = vmatprep.subr.mxu0 0.0
  %227 = vmatpush1.msra.mxu0 0.0
  %228 = vmatprep.subr.mxu0 0.0
  %229 = vmatpush1.msra.mxu0 0.0
  %230 = vmatprep.subr.mxu0 0.0
  %231 = vmatpush1.msra.mxu0 0.0
  %232 = vmatprep.subr.mxu0 0.0
  %233 = vmatpush1.msra.mxu0 0.0
  %234 = vmatprep.subr.mxu0 0.0
  %235 = vmatpush1.msra.mxu0 0.0
  %236 = vmatprep.subr.mxu0 0.0
  %237 = vmatpush1.msra.mxu0 0.0
  %238 = vmatprep.mubr.f32.mxu0 0.0
  %239 = vmatmul.mubr.f32.gmra.mrb[0].mxu0 %v172
  %v240 = vpop.f32.mrb[0].mxu0
  %v241 = vadd.f32 0.0, %v240
  %v242 = vpop.f32.mrb[0].mxu0
  %243 = vdwg.mxu0
  %v245 = vsel %vm170, %v159, 0
  %247 = vmatprep.subr.mxu0 0.0
  %248 = vmatpush1.msra.mxu0 %v158
  %249 = vmatprep.subr.mxu0 0.0
  %250 = vmatpush1.msra.mxu0 0.0
  %251 = vmatprep.subr.mxu0 0.0
  %252 = vmatpush1.msra.mxu0 0.0
  %253 = vmatprep.subr.mxu0 0.0
  %254 = vmatpush1.msra.mxu0 0.0
  %255 = vmatprep.subr.mxu0 0.0
  %256 = vmatpush1.msra.mxu0 0.0
  %257 = vmatprep.subr.mxu0 0.0
  %258 = vmatpush1.msra.mxu0 0.0
  %259 = vmatprep.subr.mxu0 0.0
  %260 = vmatpush1.msra.mxu0 0.0
  %261 = vmatprep.subr.mxu0 0.0
  %262 = vmatpush1.msra.mxu0 0.0
  %263 = vmatprep.subr.mxu0 0.0
  %264 = vmatpush1.msra.mxu0 0.0
  %265 = vmatprep.subr.mxu0 0.0
  %266 = vmatpush1.msra.mxu0 0.0
  %267 = vmatprep.subr.mxu0 0.0
  %268 = vmatpush1.msra.mxu0 0.0
  %269 = vmatprep.subr.mxu0 0.0
  %270 = vmatpush1.msra.mxu0 0.0
  %271 = vmatprep.subr.mxu0 0.0
  %272 = vmatpush1.msra.mxu0 0.0
  %273 = vmatprep.subr.mxu0 0.0
  %274 = vmatpush1.msra.mxu0 0.0
  %275 = vmatprep.subr.mxu0 0.0
  %276 = vmatpush1.msra.mxu0 0.0
  %277 = vmatprep.subr.mxu0 0.0
  %278 = vmatpush1.msra.mxu0 0.0
  %279 = vmatprep.subr.mxu0 0.0
  %280 = vmatpush1.msra.mxu0 0.0
  %281 = vmatprep.subr.mxu0 0.0
  %282 = vmatpush1.msra.mxu0 0.0
  %283 = vmatprep.subr.mxu0 0.0
  %284 = vmatpush1.msra.mxu0 0.0
  %285 = vmatprep.subr.mxu0 0.0
  %286 = vmatpush1.msra.mxu0 0.0
  %287 = vmatprep.subr.mxu0 0.0
  %288 = vmatpush1.msra.mxu0 0.0
  %289 = vmatprep.subr.mxu0 0.0
  %290 = vmatpush1.msra.mxu0 0.0
  %291 = vmatprep.subr.mxu0 0.0
  %292 = vmatpush1.msra.mxu0 0.0
  %293 = vmatprep.subr.mxu0 0.0
  %294 = vmatpush1.msra.mxu0 0.0
  %295 = vmatprep.subr.mxu0 0.0
  %296 = vmatpush1.msra.mxu0 0.0
  %297 = vmatprep.subr.mxu0 0.0
  %298 = vmatpush1.msra.mxu0 0.0
  %299 = vmatprep.subr.mxu0 0.0
  %300 = vmatpush1.msra.mxu0 0.0
  %301 = vmatprep.subr.mxu0 0.0
  %302 = vmatpush1.msra.mxu0 0.0
  %303 = vmatprep.subr.mxu0 0.0
  %304 = vmatpush1.msra.mxu0 0.0
  %305 = vmatprep.subr.mxu0 0.0
  %306 = vmatpush1.msra.mxu0 0.0
  %307 = vmatprep.subr.mxu0 0.0
  %308 = vmatpush1.msra.mxu0 0.0
  %309 = vmatprep.subr.mxu0 0.0
  %310 = vmatpush1.msra.mxu0 0.0
  %311 = vmatprep.mubr.f32.mxu0 0.0
  %312 = vmatmul.mubr.f32.gmra.mrb[0].mxu0 %v245
  %v313 = vpop.f32.mrb[0].mxu0
  %v314 = vadd.f32 %v241, %v313
  %v315 = vpop.f32.mrb[0].mxu0
  %316 = vdwg.mxu0
  %317 = vrot.lane.b32.xlu0 %v150, 7
  %v318 = vpop.permute.xlu0 %317
  %v319 = vld [vmem:[%s3 + $0x2] sm:$0x1]
  %v320 = vlaneseq
  %v321 = vshrl.u32 %v320, 7
  %v322 = vsub.s32 0, %v321
  %v323 = vrot.slane %v319, %v322
  %v324 = vmul.f32 %v318, %v323
  %s325 = scalar_lea.vmem %s2, 16
  %v326 = vld [vmem:[%s325] sm:$0xff]
  %v328 = vsel %vm170, %v326, 0
  %330 = vmatprep.subr.mxu0 0.0
  %331 = vmatpush1.msra.mxu0 %v324
  %332 = vmatprep.subr.mxu0 0.0
  %333 = vmatpush1.msra.mxu0 0.0
  %334 = vmatprep.subr.mxu0 0.0
  %335 = vmatpush1.msra.mxu0 0.0
  %336 = vmatprep.subr.mxu0 0.0
  %337 = vmatpush1.msra.mxu0 0.0
  %338 = vmatprep.subr.mxu0 0.0
  %339 = vmatpush1.msra.mxu0 0.0
  %340 = vmatprep.subr.mxu0 0.0
  %341 = vmatpush1.msra.mxu0 0.0
  %342 = vmatprep.subr.mxu0 0.0
  %343 = vmatpush1.msra.mxu0 0.0
  %344 = vmatprep.subr.mxu0 0.0
  %345 = vmatpush1.msra.mxu0 0.0
  %346 = vmatprep.subr.mxu0 0.0
  %347 = vmatpush1.msra.mxu0 0.0
  %348 = vmatprep.subr.mxu0 0.0
  %349 = vmatpush1.msra.mxu0 0.0
  %350 = vmatprep.subr.mxu0 0.0
  %351 = vmatpush1.msra.mxu0 0.0
  %352 = vmatprep.subr.mxu0 0.0
  %353 = vmatpush1.msra.mxu0 0.0
  %354 = vmatprep.subr.mxu0 0.0
  %355 = vmatpush1.msra.mxu0 0.0
  %356 = vmatprep.subr.mxu0 0.0
  %357 = vmatpush1.msra.mxu0 0.0
  %358 = vmatprep.subr.mxu0 0.0
  %359 = vmatpush1.msra.mxu0 0.0
  %360 = vmatprep.subr.mxu0 0.0
  %361 = vmatpush1.msra.mxu0 0.0
  %362 = vmatprep.subr.mxu0 0.0
  %363 = vmatpush1.msra.mxu0 0.0
  %364 = vmatprep.subr.mxu0 0.0
  %365 = vmatpush1.msra.mxu0 0.0
  %366 = vmatprep.subr.mxu0 0.0
  %367 = vmatpush1.msra.mxu0 0.0
  %368 = vmatprep.subr.mxu0 0.0
  %369 = vmatpush1.msra.mxu0 0.0
  %370 = vmatprep.subr.mxu0 0.0
  %371 = vmatpush1.msra.mxu0 0.0
  %372 = vmatprep.subr.mxu0 0.0
  %373 = vmatpush1.msra.mxu0 0.0
  %374 = vmatprep.subr.mxu0 0.0
  %375 = vmatpush1.msra.mxu0 0.0
  %376 = vmatprep.subr.mxu0 0.0
  %377 = vmatpush1.msra.mxu0 0.0
  %378 = vmatprep.subr.mxu0 0.0
  %379 = vmatpush1.msra.mxu0 0.0
  %380 = vmatprep.subr.mxu0 0.0
  %381 = vmatpush1.msra.mxu0 0.0
  %382 = vmatprep.subr.mxu0 0.0
  %383 = vmatpush1.msra.mxu0 0.0
  %384 = vmatprep.subr.mxu0 0.0
  %385 = vmatpush1.msra.mxu0 0.0
  %386 = vmatprep.subr.mxu0 0.0
  %387 = vmatpush1.msra.mxu0 0.0
  %388 = vmatprep.subr.mxu0 0.0
  %389 = vmatpush1.msra.mxu0 0.0
  %390 = vmatprep.subr.mxu0 0.0
  %391 = vmatpush1.msra.mxu0 0.0
  %392 = vmatprep.subr.mxu0 0.0
  %393 = vmatpush1.msra.mxu0 0.0
  %394 = vmatprep.mubr.f32.mxu0 0.0
  %395 = vmatmul.mubr.f32.gmra.mrb[0].mxu0 %v328
  %v396 = vpop.f32.mrb[0].mxu0
  %v397 = vadd.f32 0.0, %v396
  %v398 = vpop.f32.mrb[0].mxu0
  %399 = vdwg.mxu0
  %v400 = vadd.f32 %v314, %v397
  %401 = vrot.lane.b32.xlu0 %v150, 1
  %v402 = vpop.permute.xlu0 %401
  %v403 = vld [vmem:[%s3 + $0x3] sm:$0x1]
  %v404 = vlaneseq
  %v405 = vshrl.u32 %v404, 7
  %v406 = vsub.s32 0, %v405
  %v407 = vrot.slane %v403, %v406
  %v408 = vmul.f32 %v402, %v407
  %s409 = scalar_lea.vmem %s2, 24
  %v410 = vld [vmem:[%s409] sm:$0xff]
  %v412 = vsel %vm170, %v410, 0
  %414 = vmatprep.subr.mxu0 0.0
  %415 = vmatpush1.msra.mxu0 %v408
  %416 = vmatprep.subr.mxu0 0.0
  %417 = vmatpush1.msra.mxu0 0.0
  %418 = vmatprep.subr.mxu0 0.0
  %419 = vmatpush1.msra.mxu0 0.0
  %420 = vmatprep.subr.mxu0 0.0
  %421 = vmatpush1.msra.mxu0 0.0
  %422 = vmatprep.subr.mxu0 0.0
  %423 = vmatpush1.msra.mxu0 0.0
  %424 = vmatprep.subr.mxu0 0.0
  %425 = vmatpush1.msra.mxu0 0.0
  %426 = vmatprep.subr.mxu0 0.0
  %427 = vmatpush1.msra.mxu0 0.0
  %428 = vmatprep.subr.mxu0 0.0
  %429 = vmatpush1.msra.mxu0 0.0
  %430 = vmatprep.subr.mxu0 0.0
  %431 = vmatpush1.msra.mxu0 0.0
  %432 = vmatprep.subr.mxu0 0.0
  %433 = vmatpush1.msra.mxu0 0.0
  %434 = vmatprep.subr.mxu0 0.0
  %435 = vmatpush1.msra.mxu0 0.0
  %436 = vmatprep.subr.mxu0 0.0
  %437 = vmatpush1.msra.mxu0 0.0
  %438 = vmatprep.subr.mxu0 0.0
  %439 = vmatpush1.msra.mxu0 0.0
  %440 = vmatprep.subr.mxu0 0.0
  %441 = vmatpush1.msra.mxu0 0.0
  %442 = vmatprep.subr.mxu0 0.0
  %443 = vmatpush1.msra.mxu0 0.0
  %444 = vmatprep.subr.mxu0 0.0
  %445 = vmatpush1.msra.mxu0 0.0
  %446 = vmatprep.subr.mxu0 0.0
  %447 = vmatpush1.msra.mxu0 0.0
  %448 = vmatprep.subr.mxu0 0.0
  %449 = vmatpush1.msra.mxu0 0.0
  %450 = vmatprep.subr.mxu0 0.0
  %451 = vmatpush1.msra.mxu0 0.0
  %452 = vmatprep.subr.mxu0 0.0
  %453 = vmatpush1.msra.mxu0 0.0
  %454 = vmatprep.subr.mxu0 0.0
  %455 = vmatpush1.msra.mxu0 0.0
  %456 = vmatprep.subr.mxu0 0.0
  %457 = vmatpush1.msra.mxu0 0.0
  %458 = vmatprep.subr.mxu0 0.0
  %459 = vmatpush1.msra.mxu0 0.0
  %460 = vmatprep.subr.mxu0 0.0
  %461 = vmatpush1.msra.mxu0 0.0
  %462 = vmatprep.subr.mxu0 0.0
  %463 = vmatpush1.msra.mxu0 0.0
  %464 = vmatprep.subr.mxu0 0.0
  %465 = vmatpush1.msra.mxu0 0.0
  %466 = vmatprep.subr.mxu0 0.0
  %467 = vmatpush1.msra.mxu0 0.0
  %468 = vmatprep.subr.mxu0 0.0
  %469 = vmatpush1.msra.mxu0 0.0
  %470 = vmatprep.subr.mxu0 0.0
  %471 = vmatpush1.msra.mxu0 0.0
  %472 = vmatprep.subr.mxu0 0.0
  %473 = vmatpush1.msra.mxu0 0.0
  %474 = vmatprep.subr.mxu0 0.0
  %475 = vmatpush1.msra.mxu0 0.0
  %476 = vmatprep.subr.mxu0 0.0
  %477 = vmatpush1.msra.mxu0 0.0
  %478 = vmatprep.mubr.f32.mxu0 0.0
  %479 = vmatmul.mubr.f32.gmra.mrb[0].mxu0 %v412
  %v480 = vpop.f32.mrb[0].mxu0
  %v481 = vadd.f32 0.0, %v480
  %v482 = vpop.f32.mrb[0].mxu0
  %483 = vdwg.mxu0
  %v484 = vadd.f32 %v400, %v481
  %s485 = scalar_lea.vmem %s2, 32
  %v486 = vld [vmem:[%s485] sm:$0xff]
  %v488 = vsel %vm170, %v486, 0
  %490 = vmatprep.subr.mxu0 0.0
  %491 = vmatpush1.msra.mxu0 %v150
  %492 = vmatprep.subr.mxu0 0.0
  %493 = vmatpush1.msra.mxu0 0.0
  %494 = vmatprep.subr.mxu0 0.0
  %495 = vmatpush1.msra.mxu0 0.0
  %496 = vmatprep.subr.mxu0 0.0
  %497 = vmatpush1.msra.mxu0 0.0
  %498 = vmatprep.subr.mxu0 0.0
  %499 = vmatpush1.msra.mxu0 0.0
  %500 = vmatprep.subr.mxu0 0.0
  %501 = vmatpush1.msra.mxu0 0.0
  %502 = vmatprep.subr.mxu0 0.0
  %503 = vmatpush1.msra.mxu0 0.0
  %504 = vmatprep.subr.mxu0 0.0
  %505 = vmatpush1.msra.mxu0 0.0
  %506 = vmatprep.subr.mxu0 0.0
  %507 = vmatpush1.msra.mxu0 0.0
  %508 = vmatprep.subr.mxu0 0.0
  %509 = vmatpush1.msra.mxu0 0.0
  %510 = vmatprep.subr.mxu0 0.0
  %511 = vmatpush1.msra.mxu0 0.0
  %512 = vmatprep.subr.mxu0 0.0
  %513 = vmatpush1.msra.mxu0 0.0
  %514 = vmatprep.subr.mxu0 0.0
  %515 = vmatpush1.msra.mxu0 0.0
  %516 = vmatprep.subr.mxu0 0.0
  %517 = vmatpush1.msra.mxu0 0.0
  %518 = vmatprep.subr.mxu0 0.0
  %519 = vmatpush1.msra.mxu0 0.0
  %520 = vmatprep.subr.mxu0 0.0
  %521 = vmatpush1.msra.mxu0 0.0
  %522 = vmatprep.subr.mxu0 0.0
  %523 = vmatpush1.msra.mxu0 0.0
  %524 = vmatprep.subr.mxu0 0.0
  %525 = vmatpush1.msra.mxu0 0.0
  %526 = vmatprep.subr.mxu0 0.0
  %527 = vmatpush1.msra.mxu0 0.0
  %528 = vmatprep.subr.mxu0 0.0
  %529 = vmatpush1.msra.mxu0 0.0
  %530 = vmatprep.subr.mxu0 0.0
  %531 = vmatpush1.msra.mxu0 0.0
  %532 = vmatprep.subr.mxu0 0.0
  %533 = vmatpush1.msra.mxu0 0.0
  %534 = vmatprep.subr.mxu0 0.0
  %535 = vmatpush1.msra.mxu0 0.0
  %536 = vmatprep.subr.mxu0 0.0
  %537 = vmatpush1.msra.mxu0 0.0
  %538 = vmatprep.subr.mxu0 0.0
  %539 = vmatpush1.msra.mxu0 0.0
  %540 = vmatprep.subr.mxu0 0.0
  %541 = vmatpush1.msra.mxu0 0.0
  %542 = vmatprep.subr.mxu0 0.0
  %543 = vmatpush1.msra.mxu0 0.0
  %544 = vmatprep.subr.mxu0 0.0
  %545 = vmatpush1.msra.mxu0 0.0
  %546 = vmatprep.subr.mxu0 0.0
  %547 = vmatpush1.msra.mxu0 0.0
  %548 = vmatprep.subr.mxu0 0.0
  %549 = vmatpush1.msra.mxu0 0.0
  %550 = vmatprep.subr.mxu0 0.0
  %551 = vmatpush1.msra.mxu0 0.0
  %552 = vmatprep.subr.mxu0 0.0
  %553 = vmatpush1.msra.mxu0 0.0
  %554 = vmatprep.mubr.f32.mxu0 0.0
  %555 = vmatmul.mubr.f32.gmra.mrb[0].mxu0 %v488
  %v556 = vpop.f32.mrb[0].mxu0
  %v557 = vadd.f32 0.0, %v556
  %v558 = vpop.f32.mrb[0].mxu0
  %559 = vdwg.mxu0
  %v560 = vadd.f32 %v484, %v557
  %561 = vrot.lane.b32.xlu0 %v150, 127
  %v562 = vpop.permute.xlu0 %561
  %v563 = vld [vmem:[%s3 + $0x5] sm:$0x1]
  %v564 = vlaneseq
  %v565 = vshrl.u32 %v564, 7
  %v566 = vsub.s32 0, %v565
  %v567 = vrot.slane %v563, %v566
  %v568 = vmul.f32 %v562, %v567
  %s569 = scalar_lea.vmem %s2, 40
  %v570 = vld [vmem:[%s569] sm:$0xff]
  %v572 = vsel %vm170, %v570, 0
  %574 = vmatprep.subr.mxu0 0.0
  %575 = vmatpush1.msra.mxu0 %v568
  %576 = vmatprep.subr.mxu0 0.0
  %577 = vmatpush1.msra.mxu0 0.0
  %578 = vmatprep.subr.mxu0 0.0
  %579 = vmatpush1.msra.mxu0 0.0
  %580 = vmatprep.subr.mxu0 0.0
  %581 = vmatpush1.msra.mxu0 0.0
  %582 = vmatprep.subr.mxu0 0.0
  %583 = vmatpush1.msra.mxu0 0.0
  %584 = vmatprep.subr.mxu0 0.0
  %585 = vmatpush1.msra.mxu0 0.0
  %586 = vmatprep.subr.mxu0 0.0
  %587 = vmatpush1.msra.mxu0 0.0
  %588 = vmatprep.subr.mxu0 0.0
  %589 = vmatpush1.msra.mxu0 0.0
  %590 = vmatprep.subr.mxu0 0.0
  %591 = vmatpush1.msra.mxu0 0.0
  %592 = vmatprep.subr.mxu0 0.0
  %593 = vmatpush1.msra.mxu0 0.0
  %594 = vmatprep.subr.mxu0 0.0
  %595 = vmatpush1.msra.mxu0 0.0
  %596 = vmatprep.subr.mxu0 0.0
  %597 = vmatpush1.msra.mxu0 0.0
  %598 = vmatprep.subr.mxu0 0.0
  %599 = vmatpush1.msra.mxu0 0.0
  %600 = vmatprep.subr.mxu0 0.0
  %601 = vmatpush1.msra.mxu0 0.0
  %602 = vmatprep.subr.mxu0 0.0
  %603 = vmatpush1.msra.mxu0 0.0
  %604 = vmatprep.subr.mxu0 0.0
  %605 = vmatpush1.msra.mxu0 0.0
  %606 = vmatprep.subr.mxu0 0.0
  %607 = vmatpush1.msra.mxu0 0.0
  %608 = vmatprep.subr.mxu0 0.0
  %609 = vmatpush1.msra.mxu0 0.0
  %610 = vmatprep.subr.mxu0 0.0
  %611 = vmatpush1.msra.mxu0 0.0
  %612 = vmatprep.subr.mxu0 0.0
  %613 = vmatpush1.msra.mxu0 0.0
  %614 = vmatprep.subr.mxu0 0.0
  %615 = vmatpush1.msra.mxu0 0.0
  %616 = vmatprep.subr.mxu0 0.0
  %617 = vmatpush1.msra.mxu0 0.0
  %618 = vmatprep.subr.mxu0 0.0
  %619 = vmatpush1.msra.mxu0 0.0
  %620 = vmatprep.subr.mxu0 0.0
  %621 = vmatpush1.msra.mxu0 0.0
  %622 = vmatprep.subr.mxu0 0.0
  %623 = vmatpush1.msra.mxu0 0.0
  %624 = vmatprep.subr.mxu0 0.0
  %625 = vmatpush1.msra.mxu0 0.0
  %626 = vmatprep.subr.mxu0 0.0
  %627 = vmatpush1.msra.mxu0 0.0
  %628 = vmatprep.subr.mxu0 0.0
  %629 = vmatpush1.msra.mxu0 0.0
  %630 = vmatprep.subr.mxu0 0.0
  %631 = vmatpush1.msra.mxu0 0.0
  %632 = vmatprep.subr.mxu0 0.0
  %633 = vmatpush1.msra.mxu0 0.0
  %634 = vmatprep.subr.mxu0 0.0
  %635 = vmatpush1.msra.mxu0 0.0
  %636 = vmatprep.subr.mxu0 0.0
  %637 = vmatpush1.msra.mxu0 0.0
  %638 = vmatprep.mubr.f32.mxu0 0.0
  %639 = vmatmul.mubr.f32.gmra.mrb[0].mxu0 %v572
  %v640 = vpop.f32.mrb[0].mxu0
  %v641 = vadd.f32 0.0, %v640
  %v642 = vpop.f32.mrb[0].mxu0
  %643 = vdwg.mxu0
  %v644 = vadd.f32 %v560, %v641
  %645 = vrot.lane.b32.xlu0 %v150, 121
  %v646 = vpop.permute.xlu0 %645
  %v647 = vld [vmem:[%s3 + $0x6] sm:$0x1]
  %v648 = vlaneseq
  %v649 = vshrl.u32 %v648, 7
  %v650 = vsub.s32 0, %v649
  %v651 = vrot.slane %v647, %v650
  %v652 = vmul.f32 %v646, %v651
  %s653 = scalar_lea.vmem %s2, 48
  %v654 = vld [vmem:[%s653] sm:$0xff]
  %v656 = vsel %vm170, %v654, 0
  %658 = vmatprep.subr.mxu0 0.0
  %659 = vmatpush1.msra.mxu0 %v652
  %660 = vmatprep.subr.mxu0 0.0
  %661 = vmatpush1.msra.mxu0 0.0
  %662 = vmatprep.subr.mxu0 0.0
  %663 = vmatpush1.msra.mxu0 0.0
  %664 = vmatprep.subr.mxu0 0.0
  %665 = vmatpush1.msra.mxu0 0.0
  %666 = vmatprep.subr.mxu0 0.0
  %667 = vmatpush1.msra.mxu0 0.0
  %668 = vmatprep.subr.mxu0 0.0
  %669 = vmatpush1.msra.mxu0 0.0
  %670 = vmatprep.subr.mxu0 0.0
  %671 = vmatpush1.msra.mxu0 0.0
  %672 = vmatprep.subr.mxu0 0.0
  %673 = vmatpush1.msra.mxu0 0.0
  %674 = vmatprep.subr.mxu0 0.0
  %675 = vmatpush1.msra.mxu0 0.0
  %676 = vmatprep.subr.mxu0 0.0
  %677 = vmatpush1.msra.mxu0 0.0
  %678 = vmatprep.subr.mxu0 0.0
  %679 = vmatpush1.msra.mxu0 0.0
  %680 = vmatprep.subr.mxu0 0.0
  %681 = vmatpush1.msra.mxu0 0.0
  %682 = vmatprep.subr.mxu0 0.0
  %683 = vmatpush1.msra.mxu0 0.0
  %684 = vmatprep.subr.mxu0 0.0
  %685 = vmatpush1.msra.mxu0 0.0
  %686 = vmatprep.subr.mxu0 0.0
  %687 = vmatpush1.msra.mxu0 0.0
  %688 = vmatprep.subr.mxu0 0.0
  %689 = vmatpush1.msra.mxu0 0.0
  %690 = vmatprep.subr.mxu0 0.0
  %691 = vmatpush1.msra.mxu0 0.0
  %692 = vmatprep.subr.mxu0 0.0
  %693 = vmatpush1.msra.mxu0 0.0
  %694 = vmatprep.subr.mxu0 0.0
  %695 = vmatpush1.msra.mxu0 0.0
  %696 = vmatprep.subr.mxu0 0.0
  %697 = vmatpush1.msra.mxu0 0.0
  %698 = vmatprep.subr.mxu0 0.0
  %699 = vmatpush1.msra.mxu0 0.0
  %700 = vmatprep.subr.mxu0 0.0
  %701 = vmatpush1.msra.mxu0 0.0
  %702 = vmatprep.subr.mxu0 0.0
  %703 = vmatpush1.msra.mxu0 0.0
  %704 = vmatprep.subr.mxu0 0.0
  %705 = vmatpush1.msra.mxu0 0.0
  %706 = vmatprep.subr.mxu0 0.0
  %707 = vmatpush1.msra.mxu0 0.0
  %708 = vmatprep.subr.mxu0 0.0
  %709 = vmatpush1.msra.mxu0 0.0
  %710 = vmatprep.subr.mxu0 0.0
  %711 = vmatpush1.msra.mxu0 0.0
  %712 = vmatprep.subr.mxu0 0.0
  %713 = vmatpush1.msra.mxu0 0.0
  %714 = vmatprep.subr.mxu0 0.0
  %715 = vmatpush1.msra.mxu0 0.0
  %716 = vmatprep.subr.mxu0 0.0
  %717 = vmatpush1.msra.mxu0 0.0
  %718 = vmatprep.subr.mxu0 0.0
  %719 = vmatpush1.msra.mxu0 0.0
  %720 = vmatprep.subr.mxu0 0.0
  %721 = vmatpush1.msra.mxu0 0.0
  %722 = vmatprep.mubr.f32.mxu0 0.0
  %723 = vmatmul.mubr.f32.gmra.mrb[0].mxu0 %v656
  %v724 = vpop.f32.mrb[0].mxu0
  %v725 = vadd.f32 0.0, %v724
  %v726 = vpop.f32.mrb[0].mxu0
  %727 = vdwg.mxu0
  %v728 = vadd.f32 %v644, %v725
  %729 = vrot.lane.b32.xlu0 %v150, 120
  %v730 = vpop.permute.xlu0 %729
  %v731 = vld [vmem:[%s3 + $0x7] sm:$0x1]
  %v732 = vlaneseq
  %v733 = vshrl.u32 %v732, 7
  %v734 = vsub.s32 0, %v733
  %v735 = vrot.slane %v731, %v734
  %v736 = vmul.f32 %v730, %v735
  %s737 = scalar_lea.vmem %s2, 56
  %v738 = vld [vmem:[%s737] sm:$0xff]
  %v740 = vsel %vm170, %v738, 0
  %742 = vmatprep.subr.mxu0 0.0
  %743 = vmatpush1.msra.mxu0 %v736
  %744 = vmatprep.subr.mxu0 0.0
  %745 = vmatpush1.msra.mxu0 0.0
  %746 = vmatprep.subr.mxu0 0.0
  %747 = vmatpush1.msra.mxu0 0.0
  %748 = vmatprep.subr.mxu0 0.0
  %749 = vmatpush1.msra.mxu0 0.0
  %750 = vmatprep.subr.mxu0 0.0
  %751 = vmatpush1.msra.mxu0 0.0
  %752 = vmatprep.subr.mxu0 0.0
  %753 = vmatpush1.msra.mxu0 0.0
  %754 = vmatprep.subr.mxu0 0.0
  %755 = vmatpush1.msra.mxu0 0.0
  %756 = vmatprep.subr.mxu0 0.0
  %757 = vmatpush1.msra.mxu0 0.0
  %758 = vmatprep.subr.mxu0 0.0
  %759 = vmatpush1.msra.mxu0 0.0
  %760 = vmatprep.subr.mxu0 0.0
  %761 = vmatpush1.msra.mxu0 0.0
  %762 = vmatprep.subr.mxu0 0.0
  %763 = vmatpush1.msra.mxu0 0.0
  %764 = vmatprep.subr.mxu0 0.0
  %765 = vmatpush1.msra.mxu0 0.0
  %766 = vmatprep.subr.mxu0 0.0
  %767 = vmatpush1.msra.mxu0 0.0
  %768 = vmatprep.subr.mxu0 0.0
  %769 = vmatpush1.msra.mxu0 0.0
  %770 = vmatprep.subr.mxu0 0.0
  %771 = vmatpush1.msra.mxu0 0.0
  %772 = vmatprep.subr.mxu0 0.0
  %773 = vmatpush1.msra.mxu0 0.0
  %774 = vmatprep.subr.mxu0 0.0
  %775 = vmatpush1.msra.mxu0 0.0
  %776 = vmatprep.subr.mxu0 0.0
  %777 = vmatpush1.msra.mxu0 0.0
  %778 = vmatprep.subr.mxu0 0.0
  %779 = vmatpush1.msra.mxu0 0.0
  %780 = vmatprep.subr.mxu0 0.0
  %781 = vmatpush1.msra.mxu0 0.0
  %782 = vmatprep.subr.mxu0 0.0
  %783 = vmatpush1.msra.mxu0 0.0
  %784 = vmatprep.subr.mxu0 0.0
  %785 = vmatpush1.msra.mxu0 0.0
  %786 = vmatprep.subr.mxu0 0.0
  %787 = vmatpush1.msra.mxu0 0.0
  %788 = vmatprep.subr.mxu0 0.0
  %789 = vmatpush1.msra.mxu0 0.0
  %790 = vmatprep.subr.mxu0 0.0
  %791 = vmatpush1.msra.mxu0 0.0
  %792 = vmatprep.subr.mxu0 0.0
  %793 = vmatpush1.msra.mxu0 0.0
  %794 = vmatprep.subr.mxu0 0.0
  %795 = vmatpush1.msra.mxu0 0.0
  %796 = vmatprep.subr.mxu0 0.0
  %797 = vmatpush1.msra.mxu0 0.0
  %798 = vmatprep.subr.mxu0 0.0
  %799 = vmatpush1.msra.mxu0 0.0
  %800 = vmatprep.subr.mxu0 0.0
  %801 = vmatpush1.msra.mxu0 0.0
  %802 = vmatprep.subr.mxu0 0.0
  %803 = vmatpush1.msra.mxu0 0.0
  %804 = vmatprep.subr.mxu0 0.0
  %805 = vmatpush1.msra.mxu0 0.0
  %806 = vmatprep.mubr.f32.mxu0 0.0
  %807 = vmatmul.mubr.f32.gmra.mrb[0].mxu0 %v740
  %v808 = vpop.f32.mrb[0].mxu0
  %v809 = vadd.f32 0.0, %v808
  %v810 = vpop.f32.mrb[0].mxu0
  %811 = vdwg.mxu0
  %v812 = vadd.f32 %v728, %v809
  %813 = vrot.lane.b32.xlu0 %v150, 119
  %v814 = vpop.permute.xlu0 %813
  %v815 = vld [vmem:[%s3 + $0x8] sm:$0x1]
  %v816 = vlaneseq
  %v817 = vshrl.u32 %v816, 7
  %v818 = vsub.s32 0, %v817
  %v819 = vrot.slane %v815, %v818
  %v820 = vmul.f32 %v814, %v819
  %s821 = scalar_lea.vmem %s2, 64
  %v822 = vld [vmem:[%s821] sm:$0xff]
  %v824 = vsel %vm170, %v822, 0
  %826 = vmatprep.subr.mxu0 0.0
  %827 = vmatpush1.msra.mxu0 %v820
  %828 = vmatprep.subr.mxu0 0.0
  %829 = vmatpush1.msra.mxu0 0.0
  %830 = vmatprep.subr.mxu0 0.0
  %831 = vmatpush1.msra.mxu0 0.0
  %832 = vmatprep.subr.mxu0 0.0
  %833 = vmatpush1.msra.mxu0 0.0
  %834 = vmatprep.subr.mxu0 0.0
  %835 = vmatpush1.msra.mxu0 0.0
  %836 = vmatprep.subr.mxu0 0.0
  %837 = vmatpush1.msra.mxu0 0.0
  %838 = vmatprep.subr.mxu0 0.0
  %839 = vmatpush1.msra.mxu0 0.0
  %840 = vmatprep.subr.mxu0 0.0
  %841 = vmatpush1.msra.mxu0 0.0
  %842 = vmatprep.subr.mxu0 0.0
  %843 = vmatpush1.msra.mxu0 0.0
  %844 = vmatprep.subr.mxu0 0.0
  %845 = vmatpush1.msra.mxu0 0.0
  %846 = vmatprep.subr.mxu0 0.0
  %847 = vmatpush1.msra.mxu0 0.0
  %848 = vmatprep.subr.mxu0 0.0
  %849 = vmatpush1.msra.mxu0 0.0
  %850 = vmatprep.subr.mxu0 0.0
  %851 = vmatpush1.msra.mxu0 0.0
  %852 = vmatprep.subr.mxu0 0.0
  %853 = vmatpush1.msra.mxu0 0.0
  %854 = vmatprep.subr.mxu0 0.0
  %855 = vmatpush1.msra.mxu0 0.0
  %856 = vmatprep.subr.mxu0 0.0
  %857 = vmatpush1.msra.mxu0 0.0
  %858 = vmatprep.subr.mxu0 0.0
  %859 = vmatpush1.msra.mxu0 0.0
  %860 = vmatprep.subr.mxu0 0.0
  %861 = vmatpush1.msra.mxu0 0.0
  %862 = vmatprep.subr.mxu0 0.0
  %863 = vmatpush1.msra.mxu0 0.0
  %864 = vmatprep.subr.mxu0 0.0
  %865 = vmatpush1.msra.mxu0 0.0
  %866 = vmatprep.subr.mxu0 0.0
  %867 = vmatpush1.msra.mxu0 0.0
  %868 = vmatprep.subr.mxu0 0.0
  %869 = vmatpush1.msra.mxu0 0.0
  %870 = vmatprep.subr.mxu0 0.0
  %871 = vmatpush1.msra.mxu0 0.0
  %872 = vmatprep.subr.mxu0 0.0
  %873 = vmatpush1.msra.mxu0 0.0
  %874 = vmatprep.subr.mxu0 0.0
  %875 = vmatpush1.msra.mxu0 0.0
  %876 = vmatprep.subr.mxu0 0.0
  %877 = vmatpush1.msra.mxu0 0.0
  %878 = vmatprep.subr.mxu0 0.0
  %879 = vmatpush1.msra.mxu0 0.0
  %880 = vmatprep.subr.mxu0 0.0
  %881 = vmatpush1.msra.mxu0 0.0
  %882 = vmatprep.subr.mxu0 0.0
  %883 = vmatpush1.msra.mxu0 0.0
  %884 = vmatprep.subr.mxu0 0.0
  %885 = vmatpush1.msra.mxu0 0.0
  %886 = vmatprep.subr.mxu0 0.0
  %887 = vmatpush1.msra.mxu0 0.0
  %888 = vmatprep.subr.mxu0 0.0
  %889 = vmatpush1.msra.mxu0 0.0
  %890 = vmatprep.mubr.f32.mxu0 0.0
  %891 = vmatmul.mubr.f32.gmra.mrb[0].mxu0 %v824
  %v892 = vpop.f32.mrb[0].mxu0
  %v893 = vadd.f32 0.0, %v892
  %v894 = vpop.f32.mrb[0].mxu0
  %895 = vdwg.mxu0
  %v896 = vadd.f32 %v812, %v893
  %897 = vadd.xlane.f32.xlu0 %v896
  %v898 = vpop.xlane.xlu0 %897
  %v899 = vmul.f32 %v898, %v120
  %v900 = vmul.f32 %v896, %v896
  %901 = vadd.xlane.f32.xlu0 %v900
  %v902 = vpop.xlane.xlu0 %901
  %v903 = vmul.f32 %v902, %v120
  %v904 = vmul.f32 %v899, %v899
  %v905 = vsub.f32 %v903, %v904
  %v906 = vadd.f32 %v905, 1e-05
  %v907 = vrsqrt.pop %v906
  %v908 = vmul.f32 %v116, %v907
  %v909 = vmul.f32 %v899, %v908
  %v910 = vsub.f32 %v117, %v909
  %912 = vset.pattern.permute.xlu0 1
  %913 = vperm.xlu0 %912, %v908
  %v914 = vpop.permute.xlu0 %913
  %v916 = vmul.f32 %v896, %v914
  %918 = vset.pattern.permute.xlu0 1
  %919 = vperm.xlu0 %918, %v910
  %v920 = vpop.permute.xlu0 %919
  %v922 = vadd.f32 %v916, %v920
  %vm923 = vcmp.gt.f32.partialorder %v922, 0.0
  %v924 = vmin.f32 %v922, 0.0
  %v925 = vmul.f32 %v924, 1.442695
  %v926 = vpow.pop %v925
  %v927 = vsub.f32 %v926, 1.0
  %v928 = vsel %vm923, %v922, %v927
  %v929 = vadd.f32 %v928, %v113
  %930 = vadd.xlane.f32.xlu0 %v929
  %v931 = vpop.xlane.xlu0 %930
  %v932 = vmul.f32 %v931, %v120
  %v933 = vmul.f32 %v929, %v929
  %934 = vadd.xlane.f32.xlu0 %v933
  %v935 = vpop.xlane.xlu0 %934
  %v936 = vmul.f32 %v935, %v120
  %v937 = vmul.f32 %v932, %v932
  %v938 = vsub.f32 %v936, %v937
  %v939 = vadd.f32 %v938, 1e-05
  %v940 = vrsqrt.pop %v939
  %v941 = vmul.f32 %v116, %v940
  %v942 = vmul.f32 %v932, %v941
  %v943 = vsub.f32 %v117, %v942
  %945 = vset.pattern.permute.xlu0 2
  %946 = vperm.xlu0 %945, %v941
  %v947 = vpop.permute.xlu0 %946
  %v949 = vmul.f32 %v929, %v947
  %951 = vset.pattern.permute.xlu0 2
  %952 = vperm.xlu0 %951, %v943
  %v953 = vpop.permute.xlu0 %952
  %v955 = vadd.f32 %v949, %v953
  %vm956 = vcmp.gt.f32.partialorder %v955, 0.0
  %v957 = vmin.f32 %v955, 0.0
  %v958 = vmul.f32 %v957, 1.442695
  %v959 = vpow.pop %v958
  %v960 = vsub.f32 %v959, 1.0
  %v961 = vsel %vm956, %v955, %v960
  %962 = vst [vmem:[%s6] sm:$0xff] %v961
  // Predicated region
  $region26: #{resconv_basic_forward.1} parent=0 // pred_check
    _
  $region27: #{resconv_basic_forward.1} parent=0 // pred_check_branch
    %964 = sbr.rel (0) target = $region29
  $region28: #{resconv_basic_forward.1} parent=0 // pred_region
    _
  $region29: #{resconv_basic_forward.1} parent=0 // pred_fallthru
    _
  // Predicated region
  $region30: #{resconv_basic_forward.1} parent=0 // pred_check
    _
  $region31: #{resconv_basic_forward.1} parent=0 // pred_check_branch
    %966 = sbr.rel (0) target = $region33
  $region32: #{resconv_basic_forward.1} parent=0 // pred_region
    _
  $region33: #{resconv_basic_forward.1} parent=0 // pred_fallthru
    _

</llo_original>
